<compile_context>
chip_gen: v7x
topology: tpu7x:2x2x1
jax: 0.10.0
libtpu: 0.0.40
codegen_flags: <defaults>
</compile_context>

<pallas_src>
import functools

import jax
import jax.numpy as jnp
from jax import lax
from jax.experimental import pallas as pl
from jax.experimental.pallas import tpu as pltpu


_SQRT_HALF = 0.7071067811865476


def ffn_kernel(x_ref, w1_ref, b1_ref, w2_ref, b2_ref, o_ref, acc_ref):
    # x_ref: (tm, E_p) bf16 | w1_ref: (E_p, th) bf16 | b1_ref: (1, th) f32
    # w2_ref: (th, E_p) bf16 | b2_ref: (1, E_p) f32 | o_ref: (tm, E_p) x.dtype
    # acc_ref: (tm, E_p) f32 scratch, resident across the H (reduction) axis.
    h_idx = pl.program_id(1)

    @pl.when(h_idx == 0)
    def _():
        acc_ref[...] = jnp.zeros_like(acc_ref)

    # First linear, one H-chunk: bf16 operands, f32 accumulation on the MXU.
    h = jnp.dot(x_ref[...], w1_ref[...], preferred_element_type=jnp.float32)
    h = h + b1_ref[...]

    # Exact (erf-based) GELU in f32, matching PyTorch's default nn.GELU().
    h = 0.5 * h * (1.0 + lax.erf(h * jnp.float32(_SQRT_HALF)))

    # Second linear, same H-chunk: cast activations back to the weight dtype so
    # the MXU stays at bf16 rate; accumulate the partial product in f32.
    acc_ref[...] += jnp.dot(h.astype(w2_ref.dtype), w2_ref[...],
                            preferred_element_type=jnp.float32)

    @pl.when(h_idx == pl.num_programs(1) - 1)
    def _():
        # Dropout: identity (inference).
        o_ref[...] = (acc_ref[...] + b2_ref[...]).astype(o_ref.dtype)


def _round_up(x, m):
    return ((x + m - 1) // m) * m


def _default_vmem_limit_bytes():
    """Per-generation scoped-VMEM limit with headroom for internal scratch."""
    cap = 0
    try:
        cap = int(getattr(pltpu.get_tpu_info(), "vmem_capacity_bytes", 0))
    except Exception:
        cap = 0
    if cap <= 0:
        return 48 * 1024 * 1024  # conservative fallback: fits every generation
    # v7x (64 MiB physical) -> 48 MiB; v5e/v6e (128 MiB) -> 100 MiB.
    return max(32 * 1024 * 1024,
               min(cap - 16 * 1024 * 1024, 100 * 1024 * 1024))


def _choose_tm(M, tm):
    tm_eff = max(32, min((tm // 32) * 32, _round_up(M, 32)))
    # Shrink the row tile while padding waste exceeds ~12.5% of M.  This also
    # yields more row steps for small M (keeps both v7x TensorCores busy).
    while tm_eff > 64 and (_round_up(M, tm_eff) - M) * 8 > M:
        tm_eff //= 2
    return max(32, (tm_eff // 32) * 32)


def _choose_th(tm_eff, E_p, H_p, th, cdt_size, out_size, vmem_limit_bytes):
    """Pick the H-chunk width. th == H_p => weights effectively resident."""
    def vmem_est(th_eff):
        return (2 * tm_eff * E_p * cdt_size      # x tiles (double-buffered)
                + 2 * E_p * th_eff * cdt_size    # W1 tiles
                + 2 * th_eff * E_p * cdt_size    # W2 tiles
                + 2 * tm_eff * E_p * out_size    # out tiles
                + tm_eff * E_p * 4               # f32 accumulator scratch
                + 2 * tm_eff * th_eff * 4)       # live (tm, th) f32 intermediate

    budget = int(0.8 * vmem_limit_bytes)
    if vmem_est(H_p) <= budget:
        return H_p                               # resident-weight regime
    th_eff = max(128, min((th // 128) * 128, H_p))
    while th_eff > 128 and (H_p % th_eff != 0 or vmem_est(th_eff) > budget):
        th_eff -= 128
    return th_eff


@functools.partial(
    jax.jit,
    static_argnames=("tm", "th", "vmem_limit_bytes", "compute_dtype"))
def _ffn_forward_impl(x, w1, b1, w2, b2, *, tm, th, vmem_limit_bytes,
                      compute_dtype):
    B, T, E = x.shape
    H = w1.shape[1]
    M = B * T

    cdt = jnp.dtype(compute_dtype)
    out_dt = jnp.dtype(x.dtype)

    # Lane-dense padding of the feature dims; row padding to the row tile.
    E_p = _round_up(E, 128)
    H_p = _round_up(H, 128)
    tm_eff = _choose_tm(M, tm)
    M_p = _round_up(M, tm_eff)
    th_eff = _choose_th(tm_eff, E_p, H_p, th, cdt.itemsize, out_dt.itemsize,
                        vmem_limit_bytes)

    # bf16 (compute_dtype) operands for the MXU; biases stay f32 and are added
    # to the f32 accumulator inside the kernel.
    x2d = jnp.pad(x.reshape(M, E).astype(cdt), ((0, M_p - M), (0, E_p - E)))
    w1_p = jnp.pad(w1.astype(cdt), ((0, E_p - E), (0, H_p - H)))
    w2_p = jnp.pad(w2.astype(cdt), ((0, H_p - H), (0, E_p - E)))
    b1_p = jnp.pad(b1.astype(jnp.float32), (0, H_p - H)).reshape(1, H_p)
    b2_p = jnp.pad(b2.astype(jnp.float32), (0, E_p - E)).reshape(1, E_p)

    grid_m = M_p // tm_eff
    grid_h = H_p // th_eff
    weight_passes = 1 if th_eff == H_p else grid_m

    cost = pl.CostEstimate(
        flops=4 * M_p * E_p * H_p,                 # two (M,E,H)-sized matmuls
        transcendentals=M_p * H_p,                 # GELU nonlinearity
        bytes_accessed=(M_p * E_p * cdt.itemsize           # x in
                        + M_p * E_p * out_dt.itemsize      # out
                        + weight_passes * (w1_p.size + w2_p.size) * cdt.itemsize
                        + (b1_p.size + b2_p.size) * 4))

    out2d = pl.pallas_call(
        ffn_kernel,
        out_shape=jax.ShapeDtypeStruct((M_p, E_p), out_dt),
        grid_spec=pltpu.PrefetchScalarGridSpec(
            num_scalar_prefetch=0,
            grid=(grid_m, grid_h),
            in_specs=[
                pl.BlockSpec((tm_eff, E_p), lambda i, h: (i, 0)),   # x row tile
                pl.BlockSpec((E_p, th_eff), lambda i, h: (0, h)),   # W1 chunk
                pl.BlockSpec((1, th_eff), lambda i, h: (0, h)),     # b1 chunk
                pl.BlockSpec((th_eff, E_p), lambda i, h: (h, 0)),   # W2 chunk
                pl.BlockSpec((1, E_p), lambda i, h: (0, 0)),        # b2
            ],
            out_specs=pl.BlockSpec((tm_eff, E_p), lambda i, h: (i, 0)),
            scratch_shapes=[pltpu.VMEM((tm_eff, E_p), jnp.float32)],
        ),
        compiler_params=pltpu.CompilerParams(
            dimension_semantics=("parallel", "arbitrary"),
            vmem_limit_bytes=vmem_limit_bytes,
        ),
        cost_estimate=cost,
    )(x2d, w1_p, b1_p, w2_p, b2_p)

    return out2d[:M, :E].reshape(B, T, E)


def ffn_forward(x, w1, b1, w2, b2, *, tm=512, th=512, vmem_limit_bytes=None,
                compute_dtype=jnp.bfloat16):
    """FFN forward.  x: (B, T, E); w1: (E, H), b1: (H,); w2: (H, E), b2: (E,)."""
    if vmem_limit_bytes is None:
        vmem_limit_bytes = _default_vmem_limit_bytes()
    return _ffn_forward_impl(x, w1, b1, w2, b2, tm=tm, th=th,
                             vmem_limit_bytes=int(vmem_limit_bytes),
                             compute_dtype=jnp.dtype(compute_dtype).type)


def _reference_ffn(x, w1, b1, w2, b2, compute_dtype=jnp.bfloat16):
    # Mirrors the kernel's dtype strategy (bf16 operands, f32 accumulation,
    # exact erf GELU) so the comparison isolates the Pallas implementation.
    cdt = jnp.dtype(compute_dtype)
    M, E = x.shape[0] * x.shape[1], x.shape[-1]
    h = jnp.dot(x.reshape(M, E).astype(cdt), w1.astype(cdt),
                preferred_element_type=jnp.float32) + b1.astype(jnp.float32)
    h = 0.5 * h * (1.0 + lax.erf(h * jnp.float32(_SQRT_HALF)))
    out = jnp.dot(h.astype(cdt), w2.astype(cdt),
                  preferred_element_type=jnp.float32) + b2.astype(jnp.float32)
    return out.reshape(x.shape).astype(x.dtype)


if __name__ == "__main__":
    # Config: n_embed=32, ffn_scaling=4 -> hidden=128; batch=2, seq=8
    B, T, E, SCALE = 2, 8, 32, 4
    H = E * SCALE

    key = jax.random.PRNGKey(0)
    kx, k1, k2, k3, k4 = jax.random.split(key, 5)

    x = jax.random.normal(kx, (B, T, E), dtype=jnp.float32)

    # Deterministic param init (PyTorch-Linear-style uniform bounds), stored as
    # (in_features, out_features) so the kernel does x @ W directly.
    bound1 = 1.0 / (E ** 0.5)
    bound2 = 1.0 / (H ** 0.5)
    w1 = jax.random.uniform(k1, (E, H), jnp.float32, -bound1, bound1)
    b1 = jax.random.uniform(k2, (H,), jnp.float32, -bound1, bound1)
    w2 = jax.random.uniform(k3, (H, E), jnp.float32, -bound2, bound2)
    b2 = jax.random.uniform(k4, (E,), jnp.float32, -bound2, bound2)

    out = ffn_forward(x, w1, b1, w2, b2)
    out = jax.block_until_ready(out)

    ref = _reference_ffn(x, w1, b1, w2, b2)
    assert out.shape == (B, T, E)
    assert jnp.allclose(out, ref, atol=2e-2, rtol=2e-2), "mismatch vs reference"

    print("KERNEL_OK")
</pallas_src>

<mosaic_0001>
module attributes {stable_mosaic.version = 11 : i64} {
  func.func @ffn_kernel(%arg0: i32, %arg1: i32, %arg2: memref<32x128xbf16, #tpu.memory_space<vmem>>, %arg3: memref<128x128xbf16, #tpu.memory_space<vmem>>, %arg4: memref<1x128xf32, #tpu.memory_space<vmem>>, %arg5: memref<128x128xbf16, #tpu.memory_space<vmem>>, %arg6: memref<1x128xf32, #tpu.memory_space<vmem>>, %arg7: memref<32x128xf32, #tpu.memory_space<vmem>>, %arg8: memref<32x128xf32, #tpu.memory_space<vmem>>) attributes {dimension_semantics = [#tpu.dimension_semantics<parallel>, #tpu.dimension_semantics<arbitrary>], iteration_bounds = array<i64: 1, 1>, scalar_prefetch = 0 : i64, scratch_operands = 1 : i64, tpu.core_type = #tpu.core_type<tc>, window_params = [{transform_indices = @transform_0, window_bounds = array<i64: 32, 128>}, {transform_indices = @transform_1, window_bounds = array<i64: 128, 128>}, {transform_indices = @transform_2, window_bounds = array<i64: 1, 128>}, {transform_indices = @transform_3, window_bounds = array<i64: 128, 128>}, {pipeline_mode = #tpu.pipeline_mode<synchronous>, transform_indices = @transform_4, window_bounds = array<i64: 1, 128>}, {transform_indices = @transform_5, window_bounds = array<i64: 32, 128>}]} {
    %c0_i32 = arith.constant 0 : i32
    %0 = arith.cmpi eq, %arg1, %c0_i32 : i32
    %1 = arith.extui %0 : i1 to i32
    %c0_i32_0 = arith.constant 0 : i32
    %2 = arith.cmpi ne, %1, %c0_i32_0 : i32
    scf.if %2 {
      %cst_18 = arith.constant 0.000000e+00 : f32
      %26 = vector.broadcast %cst_18 : f32 to vector<32x128xf32>
      %c0_19 = arith.constant 0 : index
      %c0_20 = arith.constant 0 : index
      %27 = vector.load %arg8[%c0_19, %c0_20] : memref<32x128xf32, #tpu.memory_space<vmem>>, vector<32x128xf32>
      tpu.vector_store %arg8[%c0_19, %c0_20], %26 {strides = array<i32>} : memref<32x128xf32, #tpu.memory_space<vmem>>, vector<32x128xf32>,
    } else {
    }
    %c0 = arith.constant 0 : index
    %c0_1 = arith.constant 0 : index
    %3 = vector.load %arg2[%c0, %c0_1] : memref<32x128xbf16, #tpu.memory_space<vmem>>, vector<32x128xbf16>
    %c0_2 = arith.constant 0 : index
    %c0_3 = arith.constant 0 : index
    %4 = vector.load %arg3[%c0_2, %c0_3] : memref<128x128xbf16, #tpu.memory_space<vmem>>, vector<128x128xbf16>
    %cst = arith.constant dense<0.000000e+00> : vector<32x128xf32>
    %5 = tpu.matmul %3, %4, %cst {dimension_numbers = #tpu.dot_dimension_numbers<[1], [0], [0], [1], [0, 0, 1, 1], [], []>} : vector<32x128xbf16>, vector<128x128xbf16>, vector<32x128xf32> -> vector<32x128xf32>
    %c0_4 = arith.constant 0 : index
    %c0_5 = arith.constant 0 : index
    %6 = vector.load %arg4[%c0_4, %c0_5] : memref<1x128xf32, #tpu.memory_space<vmem>>, vector<1x128xf32>
    %7 = vector.broadcast %6 : vector<1x128xf32> to vector<32x128xf32>
    %8 = arith.addf %5, %7 : vector<32x128xf32>
    %cst_6 = arith.constant 5.000000e-01 : f32
    %9 = vector.broadcast %cst_6 : f32 to vector<32x128xf32>
    %10 = arith.mulf %9, %8 : vector<32x128xf32>
    %cst_7 = arith.constant 0.707106769 : f32
    %11 = vector.broadcast %cst_7 : f32 to vector<32x128xf32>
    %12 = arith.mulf %8, %11 : vector<32x128xf32>
    %13 = math.erf %12 : vector<32x128xf32>
    %cst_8 = arith.constant 1.000000e+00 : f32
    %14 = vector.broadcast %cst_8 : f32 to vector<32x128xf32>
    %15 = arith.addf %14, %13 : vector<32x128xf32>
    %16 = arith.mulf %10, %15 : vector<32x128xf32>
    %c0_9 = arith.constant 0 : index
    %c0_10 = arith.constant 0 : index
    %17 = vector.load %arg8[%c0_9, %c0_10] : memref<32x128xf32, #tpu.memory_space<vmem>>, vector<32x128xf32>
    %18 = arith.truncf %16 : vector<32x128xf32> to vector<32x128xbf16>
    %c0_11 = arith.constant 0 : index
    %c0_12 = arith.constant 0 : index
    %19 = vector.load %arg5[%c0_11, %c0_12] : memref<128x128xbf16, #tpu.memory_space<vmem>>, vector<128x128xbf16>
    %cst_13 = arith.constant dense<0.000000e+00> : vector<32x128xf32>
    %20 = tpu.matmul %18, %19, %cst_13 {dimension_numbers = #tpu.dot_dimension_numbers<[1], [0], [0], [1], [0, 0, 1, 1], [], []>} : vector<32x128xbf16>, vector<128x128xbf16>, vector<32x128xf32> -> vector<32x128xf32>
    %21 = arith.addf %17, %20 : vector<32x128xf32>
    %c0_14 = arith.constant 0 : index
    %c0_15 = arith.constant 0 : index
    %22 = vector.load %arg8[%c0_14, %c0_15] : memref<32x128xf32, #tpu.memory_space<vmem>>, vector<32x128xf32>
    tpu.vector_store %arg8[%c0_14, %c0_15], %21 {strides = array<i32>} : memref<32x128xf32, #tpu.memory_space<vmem>>, vector<32x128xf32>,
    %c0_i32_16 = arith.constant 0 : i32
    %23 = arith.cmpi eq, %arg1, %c0_i32_16 : i32
    %24 = arith.extui %23 : i1 to i32
    %c0_i32_17 = arith.constant 0 : i32
    %25 = arith.cmpi ne, %24, %c0_i32_17 : i32
    scf.if %25 {
      %c0_18 = arith.constant 0 : index
      %c0_19 = arith.constant 0 : index
      %26 = vector.load %arg8[%c0_18, %c0_19] : memref<32x128xf32, #tpu.memory_space<vmem>>, vector<32x128xf32>
      %c0_20 = arith.constant 0 : index
      %c0_21 = arith.constant 0 : index
      %27 = vector.load %arg6[%c0_20, %c0_21] : memref<1x128xf32, #tpu.memory_space<vmem>>, vector<1x128xf32>
      %28 = vector.broadcast %27 : vector<1x128xf32> to vector<32x128xf32>
      %29 = arith.addf %26, %28 : vector<32x128xf32>
      %c0_22 = arith.constant 0 : index
      %c0_23 = arith.constant 0 : index
      %30 = vector.load %arg7[%c0_22, %c0_23] : memref<32x128xf32, #tpu.memory_space<vmem>>, vector<32x128xf32>
      tpu.vector_store %arg7[%c0_22, %c0_23], %29 {strides = array<i32>} : memref<32x128xf32, #tpu.memory_space<vmem>>, vector<32x128xf32>,
    } else {
    }
    return
  }
  func.func @transform_0(%arg0: i32, %arg1: i32) -> (i32, i32) {
    %c0_i32 = arith.constant 0 : i32
    %c0_i32_0 = arith.constant 0 : i32
    return %arg0, %c0_i32 : i32, i32
  }
  func.func @transform_1(%arg0: i32, %arg1: i32) -> (i32, i32) {
    %c0_i32 = arith.constant 0 : i32
    %c0_i32_0 = arith.constant 0 : i32
    return %c0_i32, %arg1 : i32, i32
  }
  func.func @transform_2(%arg0: i32, %arg1: i32) -> (i32, i32) {
    %c0_i32 = arith.constant 0 : i32
    %c0_i32_0 = arith.constant 0 : i32
    return %c0_i32, %arg1 : i32, i32
  }
  func.func @transform_3(%arg0: i32, %arg1: i32) -> (i32, i32) {
    %c0_i32 = arith.constant 0 : i32
    %c0_i32_0 = arith.constant 0 : i32
    return %arg1, %c0_i32 : i32, i32
  }
  func.func @transform_4(%arg0: i32, %arg1: i32) -> (i32, i32) {
    %c0_i32 = arith.constant 0 : i32
    %c0_i32_0 = arith.constant 0 : i32
    %c0_i32_1 = arith.constant 0 : i32
    return %c0_i32, %c0_i32_0 : i32, i32
  }
  func.func @transform_5(%arg0: i32, %arg1: i32) -> (i32, i32) {
    %c0_i32 = arith.constant 0 : i32
    %c0_i32_0 = arith.constant 0 : i32
    return %arg0, %c0_i32 : i32, i32
  }
}

</mosaic_0001>

<llo_original>
// kernel: _ffn_forward_impl.1
$region0: #{_ffn_forward_impl.1}
  #allocation0 [shape = 'u32[]', space=smem, size = 0x4, offset = 0x4, fixed_abs, tag = 'smem constant byte address 0x4 - core index']
  #allocation1 [shape = 'u32[144,128]{1,0:T(1,128)}', space=vmem, size = 0x12000, scoped, tag = 'internal scratch']
  #allocation2 [shape = 'f32[32,128]{1,0:T(8,128)}', space=vmem, size = 0x4000, scoped, tag = 'scratch operand']
  %s0 = inlined_call_operand.vmem [shape: bf16[32,128], index: 0, kind: input, shape index: {}]
  %s1 = inlined_call_operand.vmem [shape: bf16[128,128], index: 1, kind: input, shape index: {}]
  %s2 = inlined_call_operand.vmem [shape: f32[1,128], index: 2, kind: input, shape index: {}]
  %s3 = inlined_call_operand.vmem [shape: bf16[128,128], index: 3, kind: input, shape index: {}]
  %s4 = inlined_call_operand.vmem [shape: f32[1,128], index: 4, kind: input, shape index: {}]
  %s5 = inlined_call_operand.vmem [shape: f32[32,128], index: 5, kind: output, shape index: {}]
  %s6 = sld [smem:[#allocation0]]
  $region38: #{_ffn_forward_impl.1} parent=0
    _
  %s8 = ssub.s32 1, %s6
  %s9 = scalar_select 0, %s8, %s6
  // Predicated region
  $region2: #{_ffn_forward_impl.1} parent=0 // pred_check
    _
  $region3: #{_ffn_forward_impl.1} parent=0 // pred_check_branch
    %11 = sbr.rel (0) target = $region5
  $region4: #{_ffn_forward_impl.1} parent=0 // pred_region
    _
  $region5: #{_ffn_forward_impl.1} parent=0 // pred_fallthru
    _
  // Predicated region
  $region6: #{_ffn_forward_impl.1} parent=0 // pred_check
    _
  $region7: #{_ffn_forward_impl.1} parent=0 // pred_check_branch
    %13 = sbr.rel (0) target = $region9
  $region8: #{_ffn_forward_impl.1} parent=0 // pred_region
    _
  $region9: #{_ffn_forward_impl.1} parent=0 // pred_fallthru
    _
  // Predicated region
  $region10: #{_ffn_forward_impl.1} parent=0 // pred_check
    _
  $region11: #{_ffn_forward_impl.1} parent=0 // pred_check_branch
    %15 = sbr.rel (0) target = $region13
  $region12: #{_ffn_forward_impl.1} parent=0 // pred_region
    _
  $region13: #{_ffn_forward_impl.1} parent=0 // pred_fallthru
    _
  // Predicated region
  $region14: #{_ffn_forward_impl.1} parent=0 // pred_check
    _
  $region15: #{_ffn_forward_impl.1} parent=0 // pred_check_branch
    %17 = sbr.rel (0) target = $region17
  $region16: #{_ffn_forward_impl.1} parent=0 // pred_region
    _
  $region17: #{_ffn_forward_impl.1} parent=0 // pred_fallthru
    _
  // Predicated region
  $region18: #{_ffn_forward_impl.1} parent=0 // pred_check
    _
  $region19: #{_ffn_forward_impl.1} parent=0 // pred_check_branch
    %19 = sbr.rel (0) target = $region21
  $region20: #{_ffn_forward_impl.1} parent=0 // pred_region
    _
  $region21: #{_ffn_forward_impl.1} parent=0 // pred_fallthru
    _
  %p21 = scmp.eq.s32.totalorder 0, 0
  // Predicated region
  $region22: #{_ffn_forward_impl.1} parent=0 // pred_check
    %p22 = pneg %p21
  $region23: #{_ffn_forward_impl.1} parent=0 // pred_check_branch
    %24 = sbr.rel (%p22) target = $region25
  $region24: #{_ffn_forward_impl.1} parent=0 // pred_region
    %25 = vst [vmem:[#allocation2] sm:$0xff] 0.0
    %26 = vst [vmem:[#allocation2 + $0x8] sm:$0xff] 0.0
    %27 = vst [vmem:[#allocation2 + $0x10] sm:$0xff] 0.0
    %28 = vst [vmem:[#allocation2 + $0x18] sm:$0xff] 0.0
  $region25: #{_ffn_forward_impl.1} parent=0 // pred_fallthru
    _
  %v29 = vld [vmem:[%s0] sm:$0xf]
  %v30 = vld [vmem:[%s0 + $0x4] sm:$0xf]
  %v31 = vld [vmem:[%s0 + $0x8] sm:$0xf]
  %v32 = vld [vmem:[%s0 + $0xc] sm:$0xf]
  %v33 = vld [vmem:[%s1] sm:$0xf]
  %v34 = vld [vmem:[%s1 + $0x4] sm:$0xf]
  %v35 = vld [vmem:[%s1 + $0x8] sm:$0xf]
  %v36 = vld [vmem:[%s1 + $0xc] sm:$0xf]
  %v37 = vld [vmem:[%s1 + $0x10] sm:$0xf]
  %v38 = vld [vmem:[%s1 + $0x14] sm:$0xf]
  %v39 = vld [vmem:[%s1 + $0x18] sm:$0xf]
  %v40 = vld [vmem:[%s1 + $0x1c] sm:$0xf]
  %v41 = vld [vmem:[%s1 + $0x20] sm:$0xf]
  %v42 = vld [vmem:[%s1 + $0x24] sm:$0xf]
  %v43 = vld [vmem:[%s1 + $0x28] sm:$0xf]
  %v44 = vld [vmem:[%s1 + $0x2c] sm:$0xf]
  %v45 = vld [vmem:[%s1 + $0x30] sm:$0xf]
  %v46 = vld [vmem:[%s1 + $0x34] sm:$0xf]
  %v47 = vld [vmem:[%s1 + $0x38] sm:$0xf]
  %v48 = vld [vmem:[%s1 + $0x3c] sm:$0xf]
  %v49 = vld [vmem:[%s2] sm:$0x1]
  %v51 = vlaneseq
  %v52 = vshrl.u32 %v51, 7
  %v53 = vsub.s32 0, %v52
  %v54 = vrot.slane %v49, %v53
  %v60 = vunpack.c.l.b16 %v29
  %v61 = vunpack.c.l.b16 %v30
  %v62 = vunpack.c.l.b16 %v31
  %v63 = vunpack.c.l.b16 %v32
  %v64 = vpack.c.b16 %v61, %v60
  %v65 = vpack.c.b16 %v63, %v62
  %v84 = vunpack.c.l.b16 %v33
  %v85 = vunpack.c.l.b16 %v34
  %v86 = vunpack.c.l.b16 %v35
  %v87 = vunpack.c.l.b16 %v36
  %v88 = vunpack.c.l.b16 %v37
  %v89 = vunpack.c.l.b16 %v38
  %v90 = vunpack.c.l.b16 %v39
  %v91 = vunpack.c.l.b16 %v40
  %v92 = vunpack.c.l.b16 %v41
  %v93 = vunpack.c.l.b16 %v42
  %v94 = vunpack.c.l.b16 %v43
  %v95 = vunpack.c.l.b16 %v44
  %v96 = vunpack.c.l.b16 %v45
  %v97 = vunpack.c.l.b16 %v46
  %v98 = vunpack.c.l.b16 %v47
  %v99 = vunpack.c.l.b16 %v48
  %v100 = vpack.c.b16 %v85, %v84
  %v101 = vpack.c.b16 %v87, %v86
  %v102 = vpack.c.b16 %v89, %v88
  %v103 = vpack.c.b16 %v91, %v90
  %v104 = vpack.c.b16 %v93, %v92
  %v105 = vpack.c.b16 %v95, %v94
  %v106 = vpack.c.b16 %v97, %v96
  %v107 = vpack.c.b16 %v99, %v98
  %116 = vmatprep.subr.bf16.mxu0 0
  %117 = vmatpush1.bf16.msra.mxu0 %v100
  %118 = vmatprep.subr.bf16.mxu0 0
  %119 = vmatpush1.bf16.msra.mxu0 %v101
  %120 = vmatprep.subr.bf16.mxu0 0
  %121 = vmatpush1.bf16.msra.mxu0 %v102
  %122 = vmatprep.subr.bf16.mxu0 0
  %123 = vmatpush1.bf16.msra.mxu0 %v103
  %124 = vmatprep.subr.bf16.mxu0 0
  %125 = vmatpush1.bf16.msra.mxu0 %v104
  %126 = vmatprep.subr.bf16.mxu0 0
  %127 = vmatpush1.bf16.msra.mxu0 %v105
  %128 = vmatprep.subr.bf16.mxu0 0
  %129 = vmatpush1.bf16.msra.mxu0 %v106
  %130 = vmatprep.subr.bf16.mxu0 0
  %131 = vmatpush1.bf16.msra.mxu0 %v107
  %132 = vmatprep.subr.bf16.mxu0 0
  %133 = vmatpush1.bf16.msra.mxu0 0
  %134 = vmatprep.subr.bf16.mxu0 0
  %135 = vmatpush1.bf16.msra.mxu0 0
  %136 = vmatprep.subr.bf16.mxu0 0
  %137 = vmatpush1.bf16.msra.mxu0 0
  %138 = vmatprep.subr.bf16.mxu0 0
  %139 = vmatpush1.bf16.msra.mxu0 0
  %140 = vmatprep.subr.bf16.mxu0 0
  %141 = vmatpush1.bf16.msra.mxu0 0
  %142 = vmatprep.subr.bf16.mxu0 0
  %143 = vmatpush1.bf16.msra.mxu0 0
  %144 = vmatprep.subr.bf16.mxu0 0
  %145 = vmatpush1.bf16.msra.mxu0 0
  %146 = vmatprep.subr.bf16.mxu0 0
  %147 = vmatpush1.bf16.msra.mxu0 0
  %148 = vmatprep.mubr.bf16.mxu0 0
  %149 = vmatmul.mubr.bf16.gmra.mrb[0].mxu0 %v64
  %v150 = vpop.f32.mrb[0].mxu0
  %v151 = vadd.f32 %v54, %v150
  %v152 = vpop.f32.mrb[0].mxu0
  %v153 = vpop.f32.mrb[0].mxu0
  %v154 = vadd.f32 %v54, %v153
  %v155 = vpop.f32.mrb[0].mxu0
  %156 = vmatprep.mubr.bf16.mxu0 0
  %157 = vmatmul.mubr.bf16.gmra.mrb[0].mxu0 %v65
  %v158 = vpop.f32.mrb[0].mxu0
  %v159 = vadd.f32 %v54, %v158
  %v160 = vpop.f32.mrb[0].mxu0
  %v161 = vpop.f32.mrb[0].mxu0
  %v162 = vadd.f32 %v54, %v161
  %v163 = vpop.f32.mrb[0].mxu0
  %164 = vdwg.mxu0
  %v165 = vmul.f32 %v151, 0.5
  %v166 = vmul.f32 %v154, 0.5
  %v167 = vmul.f32 %v159, 0.5
  %v168 = vmul.f32 %v162, 0.5
  %v169 = vmul.f32 %v151, 0.70710677
  %v170 = vmul.f32 %v154, 0.70710677
  %v171 = vmul.f32 %v159, 0.70710677
  %v172 = vmul.f32 %v162, 0.70710677
  %v173 = verf.f32.pop %v169
  %v174 = verf.f32.pop %v170
  %v175 = verf.f32.pop %v171
  %v176 = verf.f32.pop %v172
  %v177 = vadd.f32 %v173, 1.0
  %v178 = vadd.f32 %v174, 1.0
  %v179 = vadd.f32 %v175, 1.0
  %v180 = vadd.f32 %v176, 1.0
  %v181 = vmul.f32 %v165, %v177
  %v182 = vmul.f32 %v166, %v178
  %v183 = vmul.f32 %v167, %v179
  %v184 = vmul.f32 %v168, %v180
  %v185 = vld [vmem:[#allocation2] sm:$0xff]
  %v186 = vld [vmem:[#allocation2 + $0x8] sm:$0xff]
  %v187 = vld [vmem:[#allocation2 + $0x10] sm:$0xff]
  %v188 = vld [vmem:[#allocation2 + $0x18] sm:$0xff]
  %v189 = vpack.c.bf16 %v182, %v181
  %v190 = vpack.c.bf16 %v184, %v183
  %v191 = vld [vmem:[%s3] sm:$0xf]
  %v192 = vld [vmem:[%s3 + $0x4] sm:$0xf]
  %v193 = vld [vmem:[%s3 + $0x8] sm:$0xf]
  %v194 = vld [vmem:[%s3 + $0xc] sm:$0xf]
  %v195 = vld [vmem:[%s3 + $0x10] sm:$0xf]
  %v196 = vld [vmem:[%s3 + $0x14] sm:$0xf]
  %v197 = vld [vmem:[%s3 + $0x18] sm:$0xf]
  %v198 = vld [vmem:[%s3 + $0x1c] sm:$0xf]
  %v199 = vld [vmem:[%s3 + $0x20] sm:$0xf]
  %v200 = vld [vmem:[%s3 + $0x24] sm:$0xf]
  %v201 = vld [vmem:[%s3 + $0x28] sm:$0xf]
  %v202 = vld [vmem:[%s3 + $0x2c] sm:$0xf]
  %v203 = vld [vmem:[%s3 + $0x30] sm:$0xf]
  %v204 = vld [vmem:[%s3 + $0x34] sm:$0xf]
  %v205 = vld [vmem:[%s3 + $0x38] sm:$0xf]
  %v206 = vld [vmem:[%s3 + $0x3c] sm:$0xf]
  %v223 = vunpack.c.l.b16 %v191
  %v224 = vunpack.c.l.b16 %v192
  %v225 = vunpack.c.l.b16 %v193
  %v226 = vunpack.c.l.b16 %v194
  %v227 = vunpack.c.l.b16 %v195
  %v228 = vunpack.c.l.b16 %v196
  %v229 = vunpack.c.l.b16 %v197
  %v230 = vunpack.c.l.b16 %v198
  %v231 = vunpack.c.l.b16 %v199
  %v232 = vunpack.c.l.b16 %v200
  %v233 = vunpack.c.l.b16 %v201
  %v234 = vunpack.c.l.b16 %v202
  %v235 = vunpack.c.l.b16 %v203
  %v236 = vunpack.c.l.b16 %v204
  %v237 = vunpack.c.l.b16 %v205
  %v238 = vunpack.c.l.b16 %v206
  %v239 = vpack.c.b16 %v224, %v223
  %v240 = vpack.c.b16 %v226, %v225
  %v241 = vpack.c.b16 %v228, %v227
  %v242 = vpack.c.b16 %v230, %v229
  %v243 = vpack.c.b16 %v232, %v231
  %v244 = vpack.c.b16 %v234, %v233
  %v245 = vpack.c.b16 %v236, %v235
  %v246 = vpack.c.b16 %v238, %v237
  %255 = vmatprep.subr.bf16.mxu0 0
  %256 = vmatpush1.bf16.msra.mxu0 %v239
  %257 = vmatprep.subr.bf16.mxu0 0
  %258 = vmatpush1.bf16.msra.mxu0 %v240
  %259 = vmatprep.subr.bf16.mxu0 0
  %260 = vmatpush1.bf16.msra.mxu0 %v241
  %261 = vmatprep.subr.bf16.mxu0 0
  %262 = vmatpush1.bf16.msra.mxu0 %v242
  %263 = vmatprep.subr.bf16.mxu0 0
  %264 = vmatpush1.bf16.msra.mxu0 %v243
  %265 = vmatprep.subr.bf16.mxu0 0
  %266 = vmatpush1.bf16.msra.mxu0 %v244
  %267 = vmatprep.subr.bf16.mxu0 0
  %268 = vmatpush1.bf16.msra.mxu0 %v245
  %269 = vmatprep.subr.bf16.mxu0 0
  %270 = vmatpush1.bf16.msra.mxu0 %v246
  %271 = vmatprep.subr.bf16.mxu0 0
  %272 = vmatpush1.bf16.msra.mxu0 0
  %273 = vmatprep.subr.bf16.mxu0 0
  %274 = vmatpush1.bf16.msra.mxu0 0
  %275 = vmatprep.subr.bf16.mxu0 0
  %276 = vmatpush1.bf16.msra.mxu0 0
  %277 = vmatprep.subr.bf16.mxu0 0
  %278 = vmatpush1.bf16.msra.mxu0 0
  %279 = vmatprep.subr.bf16.mxu0 0
  %280 = vmatpush1.bf16.msra.mxu0 0
  %281 = vmatprep.subr.bf16.mxu0 0
  %282 = vmatpush1.bf16.msra.mxu0 0
  %283 = vmatprep.subr.bf16.mxu0 0
  %284 = vmatpush1.bf16.msra.mxu0 0
  %285 = vmatprep.subr.bf16.mxu0 0
  %286 = vmatpush1.bf16.msra.mxu0 0
  %287 = vmatprep.mubr.bf16.mxu0 0
  %288 = vmatmul.mubr.bf16.gmra.mrb[0].mxu0 %v189
  %v289 = vpop.f32.mrb[0].mxu0
  %v290 = vadd.f32 0.0, %v289
  %v291 = vpop.f32.mrb[0].mxu0
  %v292 = vpop.f32.mrb[0].mxu0
  %v293 = vadd.f32 0.0, %v292
  %v294 = vpop.f32.mrb[0].mxu0
  %295 = vmatprep.mubr.bf16.mxu0 0
  %296 = vmatmul.mubr.bf16.gmra.mrb[0].mxu0 %v190
  %v297 = vpop.f32.mrb[0].mxu0
  %v298 = vadd.f32 0.0, %v297
  %v299 = vpop.f32.mrb[0].mxu0
  %v300 = vpop.f32.mrb[0].mxu0
  %v301 = vadd.f32 0.0, %v300
  %v302 = vpop.f32.mrb[0].mxu0
  %303 = vdwg.mxu0
  %v304 = vadd.f32 %v185, %v290
  %v305 = vadd.f32 %v186, %v293
  %v306 = vadd.f32 %v187, %v298
  %v307 = vadd.f32 %v188, %v301
  %308 = vst [vmem:[#allocation2] sm:$0xff] %v304
  %309 = vst [vmem:[#allocation2 + $0x8] sm:$0xff] %v305
  %310 = vst [vmem:[#allocation2 + $0x10] sm:$0xff] %v306
  %311 = vst [vmem:[#allocation2 + $0x18] sm:$0xff] %v307
  // Predicated region
  $region26: #{_ffn_forward_impl.1} parent=0 // pred_check
    %p312 = pneg %p21
  $region27: #{_ffn_forward_impl.1} parent=0 // pred_check_branch
    %314 = sbr.rel (%p312) target = $region29
  $region28: #{_ffn_forward_impl.1} parent=0 // pred_region
    %v315 = vld [vmem:[#allocation2] sm:$0xff]
    %v316 = vld [vmem:[#allocation2 + $0x8] sm:$0xff]
    %v317 = vld [vmem:[#allocation2 + $0x10] sm:$0xff]
    %v318 = vld [vmem:[#allocation2 + $0x18] sm:$0xff]
    %v319 = vld [vmem:[%s4] sm:$0x1]
    %v321 = vlaneseq
    %v322 = vshrl.u32 %v321, 7
    %v323 = vsub.s32 0, %v322
    %v324 = vrot.slane %v319, %v323
    %v326 = vadd.f32 %v315, %v324
    %v327 = vadd.f32 %v316, %v324
    %v328 = vadd.f32 %v317, %v324
    %v329 = vadd.f32 %v318, %v324
    %330 = vst [vmem:[%s5] sm:$0xff] %v326
    %331 = vst [vmem:[%s5 + $0x8] sm:$0xff] %v327
    %332 = vst [vmem:[%s5 + $0x10] sm:$0xff] %v328
    %333 = vst [vmem:[%s5 + $0x18] sm:$0xff] %v329
  $region29: #{_ffn_forward_impl.1} parent=0 // pred_fallthru
    _
  // Predicated region
  $region30: #{_ffn_forward_impl.1} parent=0 // pred_check
    _
  $region31: #{_ffn_forward_impl.1} parent=0 // pred_check_branch
    %335 = sbr.rel (0) target = $region33
  $region32: #{_ffn_forward_impl.1} parent=0 // pred_region
    _
  $region33: #{_ffn_forward_impl.1} parent=0 // pred_fallthru
    _
  // Predicated region
  $region34: #{_ffn_forward_impl.1} parent=0 // pred_check
    _
  $region35: #{_ffn_forward_impl.1} parent=0 // pred_check_branch
    %337 = sbr.rel (0) target = $region37
  $region36: #{_ffn_forward_impl.1} parent=0 // pred_region
    _
  $region37: #{_ffn_forward_impl.1} parent=0 // pred_fallthru
    _

</llo_original>
